<compile_context>
chip_gen: v7x
topology: tpu7x:2x2x1
jax: 0.10.0
libtpu: 0.0.40
codegen_flags: <defaults>
</compile_context>

<pallas_src>
import jax
import jax.numpy as jnp
from jax import lax
from jax.experimental import pallas as pl
from jax.experimental.pallas import tpu as pltpu

LN_EPS = 1e-5          # torch.nn.LayerNorm default
_ALIGN = 8             # sublane granularity of the (8, 128) tiling rule
_MAX_TS = 512          # hard cap on tokens per grid block
_DMA_UNROLL = 8        # unroll factor for the per-row DMA issue/wait loops


def _vmem_capacity_bytes() -> int:
    """Generation-aware VMEM capacity (v5e/v6e: 128 MiB, v7x: 64 MiB/core)."""
    try:
        cap = getattr(pltpu.get_tpu_info(), "vmem_capacity_bytes", None)
        if cap:
            return int(cap)
    except Exception:
        pass
    return 64 << 20    # assume the most constrained listed generation (v7x)


def _pick_seq_block(S: int, per_token_bytes: int, vmem_cap: int) -> int:
    """Tokens per grid block: a multiple of 8 dividing S, or the whole
    sequence (full-dim blocks are exempt from the (8,128) constraint)."""
    budget = max(vmem_cap // 3, 1 << 20)   # spend <= ~1/3 of VMEM on token slabs
    cap = min(_MAX_TS, max(_ALIGN, budget // max(per_token_bytes, 1)))
    cap -= cap % _ALIGN
    cap = max(cap, _ALIGN)
    if S <= cap:
        return S
    for ts in range(cap, _ALIGN - 1, -_ALIGN):
        if S % ts == 0:
            return ts
    return S   # no aligned divisor below the cap: one full-sequence block


def enhanced_tokenizer_forward(input_ids, token_type_ids, params,
                               out_dtype=jnp.float32,
                               force_hbm_gather=False):
    """params: 'word' [V,H], 'pos' [P,H], 'type' [T,H], 'gamma' [H], 'beta' [H].
    Tables may be float32 or bfloat16; LayerNorm math is always f32.
    Returns [B, S, H] in `out_dtype`."""
    B, S = input_ids.shape
    word = params["word"]
    pos = params["pos"]
    typ = params["type"]
    V, H = word.shape
    P = pos.shape[0]
    T = typ.shape[0]
    assert S <= P, "sequence length exceeds max_position_embeddings"

    word_it = jnp.dtype(word.dtype).itemsize
    pos_it = jnp.dtype(pos.dtype).itemsize
    out_it = jnp.dtype(out_dtype).itemsize

    # --- generation-aware tiling / VMEM budgeting ---------------------------
    vmem_cap = _vmem_capacity_bytes()
    per_token = H * (2 * word_it + 2 * pos_it + 2 * out_it) + 2 * 128 * 4
    TS = _pick_seq_block(S, per_token, vmem_cap)
    assert S % TS == 0
    num_sb = S // TS

    # Small-vocab path: keep the word table VMEM-resident and gather with a
    # one-hot MXU matmul (no DMA descriptors at all).
    word_bytes = V * H * word_it
    use_resident = (not force_hbm_gather
                    and V <= 4096
                    and word_bytes <= min(8 << 20, vmem_cap // 8))

    slab = TS * H
    if use_resident:
        need = (word_bytes + 2 * slab * pos_it + 2 * slab * out_it
                + 4 * TS * 128 * 4 + T * H * word_it + 2 * H * 4)
    else:
        need = (2 * slab * word_it + 2 * slab * pos_it + 2 * slab * out_it
                + 2 * TS * 128 * 4 + T * H * word_it + 2 * H * 4)
    vmem_limit = int(min(max(32 << 20, need + (8 << 20)), vmem_cap - (2 << 20)))

    # --- wrapper-side layout plumbing ---------------------------------------
    pos_s = pos[:S]                                        # (S, H): TS==S blocks legal
    gamma2d = params["gamma"].reshape(1, H).astype(jnp.float32)
    beta2d = params["beta"].reshape(1, H).astype(jnp.float32)

    if token_type_ids is None:
        # The PyTorch forward skips the token-type add when ids are None;
        # a zero table reproduces that without a second kernel variant.
        tt3 = jnp.zeros((B, S, 1), jnp.int32)
        type_mat = jnp.zeros((T, H), typ.dtype)
    else:
        tt3 = token_type_ids.reshape(B, S, 1).astype(jnp.int32)
        # row 0 = table[0] (base); row t>=1 = table[t] - table[0] (delta_t)
        type_mat = (jnp.concatenate([typ[:1], typ[1:] - typ[:1]], axis=0)
                    if T > 1 else typ)

    ids3 = input_ids.reshape(B, S, 1).astype(jnp.int32)    # vector ids (resident path)
    ids_flat = input_ids.reshape(-1).astype(jnp.int32)     # SMEM ids (HBM path)

    out_shape = jax.ShapeDtypeStruct((B, S, H), out_dtype)

    def _finish(x, tt_col, type_ref, g_ref, beta_ref, o_ref):
        """Token-type add (base + delta FMA) + f32 LayerNorm + store."""
        x = x + type_ref[0:1, :].astype(jnp.float32)
        for t in range(1, T):
            x = x + ((tt_col == t).astype(jnp.float32)
                     * type_ref[t:t + 1, :].astype(jnp.float32))
        mean = jnp.mean(x, axis=-1, keepdims=True)
        xc = x - mean
        var = jnp.mean(xc * xc, axis=-1, keepdims=True)
        y = xc * lax.rsqrt(var + LN_EPS) * g_ref[...] + beta_ref[...]
        # Dropout: inference-mode identity.
        o_ref[...] = y.astype(o_ref.dtype)

    # ========================================================================
    # Path A: word table resident in VMEM, one-hot MXU gather.
    # ========================================================================
    if use_resident:
        def kernel(word_ref, pos_ref, ids_ref, tt_ref, type_ref,
                   g_ref, beta_ref, o_ref):
            ids_col = ids_ref[...]                                   # (TS, 1) i32
            onehot = (ids_col ==
                      lax.broadcasted_iota(jnp.int32, (TS, V), 1)
                      ).astype(word.dtype)                           # (TS, V)
            w = jnp.dot(onehot, word_ref[...],
                        preferred_element_type=jnp.float32)          # (TS, H) f32
            x = w + pos_ref[...].astype(jnp.float32)
            _finish(x, tt_ref[...], type_ref, g_ref, beta_ref, o_ref)

        grid_spec = pltpu.PrefetchScalarGridSpec(
            num_scalar_prefetch=0,
            grid=(num_sb, B),                       # sb outer: pos fetched once per sb
            in_specs=[
                pl.BlockSpec((V, H), lambda s, b: (0, 0)),              # resident word
                pl.BlockSpec((TS, H), lambda s, b: (s, 0)),             # positions
                pl.BlockSpec((pl.Squeezed(), TS, 1), lambda s, b: (b, s, 0)),  # ids
                pl.BlockSpec((pl.Squeezed(), TS, 1), lambda s, b: (b, s, 0)),  # types
                pl.BlockSpec((T, H), lambda s, b: (0, 0)),              # base/delta
                pl.BlockSpec((1, H), lambda s, b: (0, 0)),              # gamma
                pl.BlockSpec((1, H), lambda s, b: (0, 0)),              # beta
            ],
            out_specs=pl.BlockSpec((pl.Squeezed(), TS, H), lambda s, b: (b, s, 0)),
        )
        return pl.pallas_call(
            kernel,
            grid_spec=grid_spec,
            out_shape=out_shape,
            compiler_params=pltpu.CompilerParams(
                dimension_semantics=("parallel", "parallel"),
                vmem_limit_bytes=vmem_limit),
        )(word, pos_s, ids3, tt3, type_mat, gamma2d, beta2d)

    # ========================================================================
    # Path B: word table in HBM; per-row DMA gather, double-buffered across
    # grid steps (gather for step i+1 overlaps the compute of step i).
    # ========================================================================
    def kernel(ids_ref,                    # SMEM [B*S] i32 (scalar prefetch)
               word_hbm,                   # HBM  [V, H]  (pl.ANY, manual DMA)
               pos_ref, tt_ref, type_ref, g_ref, beta_ref,
               o_ref,
               wbuf, sems):                # (2, TS, H) scratch + 2 DMA sems
        sb = pl.program_id(0)
        bi = pl.program_id(1)
        nb = pl.num_programs(1)
        slot = bi % 2

        def make_row_copy(bb, r, sl):
            tok = ids_ref[bb * S + sb * TS + r]
            return pltpu.make_async_copy(
                word_hbm.at[pl.ds(tok, 1), :],
                wbuf.at[sl, pl.ds(r, 1), :],
                sems.at[sl])

        def issue_block(bb, sl):
            def body(r, c):
                make_row_copy(bb, r, sl).start()
                return c
            lax.fori_loop(0, TS, body, 0, unroll=_DMA_UNROLL)

        def wait_block(bb, sl):
            def body(r, c):
                # Real matching descriptor (same src/dst/sem as the start).
                make_row_copy(bb, r, sl).wait()
                return c
            lax.fori_loop(0, TS, body, 0, unroll=_DMA_UNROLL)

        # Prologue: the first inner step fetches its own rows (exposed once per
        # outer sequence block); later steps' rows were prefetched previously.
        @pl.when(bi == 0)
        def _():
            issue_block(0, 0)

        wait_block(bi, slot)

        # Prefetch the NEXT batch row's rows into the other slot so those TS
        # DMAs overlap with this step's VPU / LayerNorm work.
        @pl.when(bi + 1 < nb)
        def _():
            issue_block(bi + 1, (bi + 1) % 2)

        x = wbuf[slot].astype(jnp.float32) + pos_ref[...].astype(jnp.float32)
        _finish(x, tt_ref[...], type_ref, g_ref, beta_ref, o_ref)

    grid_spec = pltpu.PrefetchScalarGridSpec(
        num_scalar_prefetch=1,
        grid=(num_sb, B),                          # sb outer: pos fetched once per sb
        in_specs=[
            pl.BlockSpec(memory_space=pl.ANY),                          # word in HBM
            pl.BlockSpec((TS, H), lambda s, b, ids: (s, 0)),            # positions
            pl.BlockSpec((pl.Squeezed(), TS, 1), lambda s, b, ids: (b, s, 0)),  # types
            pl.BlockSpec((T, H), lambda s, b, ids: (0, 0)),             # base/delta
            pl.BlockSpec((1, H), lambda s, b, ids: (0, 0)),             # gamma
            pl.BlockSpec((1, H), lambda s, b, ids: (0, 0)),             # beta
        ],
        out_specs=pl.BlockSpec((pl.Squeezed(), TS, H), lambda s, b, ids: (b, s, 0)),
        scratch_shapes=[
            pltpu.VMEM((2, TS, H), word.dtype),     # double-buffered gather dst
            pltpu.SemaphoreType.DMA((2,)),          # one DMA semaphore per slot
        ],
    )
    return pl.pallas_call(
        kernel,
        grid_spec=grid_spec,
        out_shape=out_shape,
        compiler_params=pltpu.CompilerParams(
            # Outer (sequence-block) axis shards across TensorCores on v7x;
            # the inner batch axis must stay sequential because of the
            # cross-step DMA prefetch into the alternate buffer slot.
            dimension_semantics=("parallel", "arbitrary"),
            vmem_limit_bytes=vmem_limit),
    )(ids_flat, word, pos_s, tt3, type_mat, gamma2d, beta2d)


def _reference_forward(input_ids, token_type_ids, params):
    S = input_ids.shape[1]
    emb = jnp.take(params["word"].astype(jnp.float32), input_ids, axis=0)
    emb = emb + params["pos"].astype(jnp.float32)[:S][None, :, :]
    if token_type_ids is not None:
        emb = emb + jnp.take(params["type"].astype(jnp.float32),
                             token_type_ids, axis=0)
    mean = jnp.mean(emb, axis=-1, keepdims=True)
    var = jnp.mean((emb - mean) ** 2, axis=-1, keepdims=True)
    y = (emb - mean) * lax.rsqrt(var + LN_EPS)
    return y * params["gamma"] + params["beta"]


if __name__ == "__main__":
    # Small, forward-consistent shapes.
    vocab_size = 1000
    hidden_size = 128
    max_position_embeddings = 64
    num_token_types = 2
    B, S = 2, 8

    key = jax.random.PRNGKey(0)
    k_w, k_p, k_t, k_ids, k_tt = jax.random.split(key, 5)

    # Deterministic init matching nn.init.normal_(std=0.02); LayerNorm = (1, 0).
    params = {
        "word": 0.02 * jax.random.normal(k_w, (vocab_size, hidden_size), jnp.float32),
        "pos": 0.02 * jax.random.normal(k_p, (max_position_embeddings, hidden_size), jnp.float32),
        "type": 0.02 * jax.random.normal(k_t, (num_token_types, hidden_size), jnp.float32),
        "gamma": jnp.ones((hidden_size,), jnp.float32),
        "beta": jnp.zeros((hidden_size,), jnp.float32),
    }
    input_ids = jax.random.randint(k_ids, (B, S), 0, vocab_size, dtype=jnp.int32)
    token_type_ids = jax.random.randint(k_tt, (B, S), 0, num_token_types, dtype=jnp.int32)

    ref = _reference_forward(input_ids, token_type_ids, params)

    # Path A (auto-selected for this small vocab): VMEM-resident word table.
    out = jax.block_until_ready(
        enhanced_tokenizer_forward(input_ids, token_type_ids, params))
    assert out.shape == (B, S, hidden_size)
    assert jnp.allclose(out, ref, atol=1e-4, rtol=1e-4), "resident path mismatch"

    # Path B (general path): HBM word table, double-buffered per-row DMA gather.
    out_hbm = jax.block_until_ready(
        enhanced_tokenizer_forward(input_ids, token_type_ids, params,
                                   force_hbm_gather=True))
    assert jnp.allclose(out_hbm, ref, atol=1e-4, rtol=1e-4), "hbm-gather path mismatch"

    print("KERNEL_OK")
</pallas_src>

<mosaic_0001>
module attributes {stable_mosaic.version = 11 : i64} {
  func.func @kernel(%arg0: i32, %arg1: i32, %arg2: memref<1000x128xf32, #tpu.memory_space<vmem>>, %arg3: memref<8x128xf32, #tpu.memory_space<vmem>>, %arg4: memref<1x8x1xi32, #tpu.memory_space<vmem>>, %arg5: memref<1x8x1xi32, #tpu.memory_space<vmem>>, %arg6: memref<2x128xf32, #tpu.memory_space<vmem>>, %arg7: memref<1x128xf32, #tpu.memory_space<vmem>>, %arg8: memref<1x128xf32, #tpu.memory_space<vmem>>, %arg9: memref<1x8x128xf32, #tpu.memory_space<vmem>>) attributes {dimension_semantics = [#tpu.dimension_semantics<parallel>, #tpu.dimension_semantics<parallel>], iteration_bounds = array<i64: 1, 2>, scalar_prefetch = 0 : i64, scratch_operands = 0 : i64, tpu.core_type = #tpu.core_type<tc>, window_params = [{pipeline_mode = #tpu.pipeline_mode<synchronous>, transform_indices = @transform_0, window_bounds = array<i64: 1000, 128>}, {transform_indices = @transform_1, window_bounds = array<i64: 8, 128>}, {transform_indices = @transform_2, window_bounds = array<i64: 1, 8, 1>}, {transform_indices = @transform_3, window_bounds = array<i64: 1, 8, 1>}, {pipeline_mode = #tpu.pipeline_mode<synchronous>, transform_indices = @transform_4, window_bounds = array<i64: 2, 128>}, {pipeline_mode = #tpu.pipeline_mode<synchronous>, transform_indices = @transform_5, window_bounds = array<i64: 1, 128>}, {pipeline_mode = #tpu.pipeline_mode<synchronous>, transform_indices = @transform_6, window_bounds = array<i64: 1, 128>}, {transform_indices = @transform_7, window_bounds = array<i64: 1, 8, 128>}]} {
    %c0 = arith.constant 0 : index
    %c0_0 = arith.constant 0 : index
    %c0_1 = arith.constant 0 : index
    %0 = vector.load %arg4[%c0, %c0_0, %c0_1] : memref<1x8x1xi32, #tpu.memory_space<vmem>>, vector<1x8x1xi32>
    %1 = vector.shape_cast %0 : vector<1x8x1xi32> to vector<8x1xi32>
    %2 = tpu.iota {dimensions = array<i32: 1>} : vector<8x1000xi32>
    %3 = vector.broadcast %1 : vector<8x1xi32> to vector<8x1000xi32>
    %4 = arith.cmpi eq, %3, %2 : vector<8x1000xi32>
    %5 = arith.extui %4 : vector<8x1000xi1> to vector<8x1000xi32>
    %6 = arith.sitofp %5 : vector<8x1000xi32> to vector<8x1000xf32>
    %c0_2 = arith.constant 0 : index
    %c0_3 = arith.constant 0 : index
    %7 = vector.load %arg2[%c0_2, %c0_3] : memref<1000x128xf32, #tpu.memory_space<vmem>>, vector<1000x128xf32>
    %cst = arith.constant dense<0.000000e+00> : vector<8x128xf32>
    %8 = tpu.matmul %6, %7, %cst {dimension_numbers = #tpu.dot_dimension_numbers<[1], [0], [0], [1], [0, 0, 1, 1], [], []>} : vector<8x1000xf32>, vector<1000x128xf32>, vector<8x128xf32> -> vector<8x128xf32>
    %c0_4 = arith.constant 0 : index
    %c0_5 = arith.constant 0 : index
    %9 = vector.load %arg3[%c0_4, %c0_5] : memref<8x128xf32, #tpu.memory_space<vmem>>, vector<8x128xf32>
    %10 = arith.addf %8, %9 : vector<8x128xf32>
    %c0_6 = arith.constant 0 : index
    %c0_7 = arith.constant 0 : index
    %c0_8 = arith.constant 0 : index
    %11 = vector.load %arg5[%c0_6, %c0_7, %c0_8] : memref<1x8x1xi32, #tpu.memory_space<vmem>>, vector<1x8x1xi32>
    %12 = vector.shape_cast %11 : vector<1x8x1xi32> to vector<8x1xi32>
    %c0_9 = arith.constant 0 : index
    %c0_10 = arith.constant 0 : index
    %13 = vector.load %arg6[%c0_9, %c0_10] : memref<2x128xf32, #tpu.memory_space<vmem>>, vector<1x128xf32>
    %14 = vector.broadcast %13 : vector<1x128xf32> to vector<8x128xf32>
    %15 = arith.addf %10, %14 : vector<8x128xf32>
    %c1_i32 = arith.constant 1 : i32
    %16 = vector.broadcast %c1_i32 : i32 to vector<8x1xi32>
    %17 = arith.cmpi eq, %12, %16 : vector<8x1xi32>
    %18 = arith.extui %17 : vector<8x1xi1> to vector<8x1xi32>
    %19 = arith.sitofp %18 : vector<8x1xi32> to vector<8x1xf32>
    %c1 = arith.constant 1 : index
    %c0_11 = arith.constant 0 : index
    %20 = vector.load %arg6[%c1, %c0_11] : memref<2x128xf32, #tpu.memory_space<vmem>>, vector<1x128xf32>
    %21 = vector.broadcast %19 : vector<8x1xf32> to vector<8x128xf32>
    %22 = vector.broadcast %20 : vector<1x128xf32> to vector<8x128xf32>
    %23 = arith.mulf %21, %22 : vector<8x128xf32>
    %24 = arith.addf %15, %23 : vector<8x128xf32>
    %cst_12 = arith.constant dense<0.000000e+00> : vector<8xf32>
    %25 = vector.multi_reduction <add>, %24, %cst_12 [1] : vector<8x128xf32> to vector<8xf32>
    %26 = vector.shape_cast %25 : vector<8xf32> to vector<8x1xf32>
    %cst_13 = arith.constant 1.280000e+02 : f32
    %27 = vector.broadcast %cst_13 : f32 to vector<8x1xf32>
    %28 = arith.divf %26, %27 : vector<8x1xf32>
    %29 = vector.broadcast %28 : vector<8x1xf32> to vector<8x128xf32>
    %30 = arith.subf %24, %29 : vector<8x128xf32>
    %31 = arith.mulf %30, %30 : vector<8x128xf32>
    %cst_14 = arith.constant dense<0.000000e+00> : vector<8xf32>
    %32 = vector.multi_reduction <add>, %31, %cst_14 [1] : vector<8x128xf32> to vector<8xf32>
    %33 = vector.shape_cast %32 : vector<8xf32> to vector<8x1xf32>
    %cst_15 = arith.constant 1.280000e+02 : f32
    %34 = vector.broadcast %cst_15 : f32 to vector<8x1xf32>
    %35 = arith.divf %33, %34 : vector<8x1xf32>
    %cst_16 = arith.constant 9.99999974E-6 : f32
    %36 = vector.broadcast %cst_16 : f32 to vector<8x1xf32>
    %37 = arith.addf %35, %36 : vector<8x1xf32>
    %38 = math.rsqrt %37 : vector<8x1xf32>
    %39 = vector.broadcast %38 : vector<8x1xf32> to vector<8x128xf32>
    %40 = arith.mulf %30, %39 : vector<8x128xf32>
    %c0_17 = arith.constant 0 : index
    %c0_18 = arith.constant 0 : index
    %41 = vector.load %arg7[%c0_17, %c0_18] : memref<1x128xf32, #tpu.memory_space<vmem>>, vector<1x128xf32>
    %42 = vector.broadcast %41 : vector<1x128xf32> to vector<8x128xf32>
    %43 = arith.mulf %40, %42 : vector<8x128xf32>
    %c0_19 = arith.constant 0 : index
    %c0_20 = arith.constant 0 : index
    %44 = vector.load %arg8[%c0_19, %c0_20] : memref<1x128xf32, #tpu.memory_space<vmem>>, vector<1x128xf32>
    %45 = vector.broadcast %44 : vector<1x128xf32> to vector<8x128xf32>
    %46 = arith.addf %43, %45 : vector<8x128xf32>
    %c0_21 = arith.constant 0 : index
    %c0_22 = arith.constant 0 : index
    %c0_23 = arith.constant 0 : index
    %47 = vector.load %arg9[%c0_21, %c0_22, %c0_23] : memref<1x8x128xf32, #tpu.memory_space<vmem>>, vector<1x8x128xf32>
    %48 = vector.shape_cast %47 : vector<1x8x128xf32> to vector<8x128xf32>
    %49 = vector.shape_cast %46 : vector<8x128xf32> to vector<1x8x128xf32>
    tpu.vector_store %arg9[%c0_21, %c0_22, %c0_23], %49 {strides = array<i32>} : memref<1x8x128xf32, #tpu.memory_space<vmem>>, vector<1x8x128xf32>,
    return
  }
  func.func @transform_0(%arg0: i32, %arg1: i32) -> (i32, i32) {
    %c0_i32 = arith.constant 0 : i32
    %c0_i32_0 = arith.constant 0 : i32
    %c0_i32_1 = arith.constant 0 : i32
    return %c0_i32, %c0_i32_0 : i32, i32
  }
  func.func @transform_1(%arg0: i32, %arg1: i32) -> (i32, i32) {
    %c0_i32 = arith.constant 0 : i32
    %c0_i32_0 = arith.constant 0 : i32
    return %arg0, %c0_i32 : i32, i32
  }
  func.func @transform_2(%arg0: i32, %arg1: i32) -> (i32, i32, i32) {
    %c0_i32 = arith.constant 0 : i32
    %c0_i32_0 = arith.constant 0 : i32
    return %arg1, %arg0, %c0_i32 : i32, i32, i32
  }
  func.func @transform_3(%arg0: i32, %arg1: i32) -> (i32, i32, i32) {
    %c0_i32 = arith.constant 0 : i32
    %c0_i32_0 = arith.constant 0 : i32
    return %arg1, %arg0, %c0_i32 : i32, i32, i32
  }
  func.func @transform_4(%arg0: i32, %arg1: i32) -> (i32, i32) {
    %c0_i32 = arith.constant 0 : i32
    %c0_i32_0 = arith.constant 0 : i32
    %c0_i32_1 = arith.constant 0 : i32
    return %c0_i32, %c0_i32_0 : i32, i32
  }
  func.func @transform_5(%arg0: i32, %arg1: i32) -> (i32, i32) {
    %c0_i32 = arith.constant 0 : i32
    %c0_i32_0 = arith.constant 0 : i32
    %c0_i32_1 = arith.constant 0 : i32
    return %c0_i32, %c0_i32_0 : i32, i32
  }
  func.func @transform_6(%arg0: i32, %arg1: i32) -> (i32, i32) {
    %c0_i32 = arith.constant 0 : i32
    %c0_i32_0 = arith.constant 0 : i32
    %c0_i32_1 = arith.constant 0 : i32
    return %c0_i32, %c0_i32_0 : i32, i32
  }
  func.func @transform_7(%arg0: i32, %arg1: i32) -> (i32, i32, i32) {
    %c0_i32 = arith.constant 0 : i32
    %c0_i32_0 = arith.constant 0 : i32
    return %arg1, %arg0, %c0_i32 : i32, i32, i32
  }
}

</mosaic_0001>

<llo_original>
// kernel: tpu_custom_call.1
$region0: #{tpu_custom_call.1}
  #allocation0 [shape = 'u32[]', space=smem, size = 0x4, offset = 0x4, fixed_abs, tag = 'smem constant byte address 0x4 - core index']
  #allocation1 [shape = 'u32[144,128]{1,0:T(1,128)}', space=vmem, size = 0x12000, scoped, tag = 'internal scratch']
  %s0 = inlined_call_operand.hbm [shape: f32[1000,128], index: 0, kind: input, shape index: {}]
  %s1 = inlined_call_operand.vmem [shape: f32[8,128], index: 1, kind: input, shape index: {}]
  %s2 = inlined_call_operand.vmem [shape: s32[2,8,1], index: 2, kind: input, shape index: {}]
  %s3 = inlined_call_operand.vmem [shape: s32[2,8,1], index: 3, kind: input, shape index: {}]
  %s4 = inlined_call_operand.vmem [shape: f32[2,128], index: 4, kind: input, shape index: {}]
  %s5 = inlined_call_operand.vmem [shape: f32[1,128], index: 5, kind: input, shape index: {}]
  %s6 = inlined_call_operand.vmem [shape: f32[1,128], index: 6, kind: input, shape index: {}]
  %s7 = inlined_call_operand.hbm [shape: f32[2,8,128], index: 7, kind: output, shape index: {}]
  %s8 = sld [smem:[#allocation0]]
  $region65: #{tpu_custom_call.1} parent=0
    _
  %s10 = ssub.s32 1, %s8
  %s11 = scalar_select 0, %s10, %s8
  $region1: #{tpu_custom_call.1} parent=0
    #allocation2 [shape = 'u8[512000]{0}', space=vmem, size = 0x7d000, scoped, tag = 'input window, operand 0, single buffered']
    #allocation3 [shape = 's32[2]{0}', space=sflag, size = 0x8, scoped, tag = 'scoped memory for tpu_custom_call.1']
    #allocation4 [shape = 's32[2]{0}', space=sflag, size = 0x8, scoped, tag = 'scoped memory for tpu_custom_call.1']
    #allocation5 [shape = 'u8[8192]{0}', space=vmem, size = 0x2000, scoped, tag = 'output window, operand 0']
    %12 = vsyncpa [#allocation3], 0
    %13 = vsyncpa [#allocation4], 0
    %s14 = scalar_lea.sflag [#allocation4], 1
    %15 = vsyncpa %s14, 0
    loop: start=0, step=1, limit=4
    $region2: #{tpu_custom_call.1} parent=1 // loop_pre_header
      _
    $region3: #{tpu_custom_call.1} parent=1 // loop_header
      %s17 = sphi 0, %s21
      %p18 = scmp.ge.s32.totalorder %s17, 4
      %s24 = sphi 0, %s36
      %s25 = sphi 0, %s32
      %s26 = sphi 0, %s24
      %s27 = sphi 0, %s25
      %s28 = sphi 0, %s26
      %s29 = sphi 0, %s27
      %s37 = sphi 0, %s37
      %s39 = sphi 0, %s37
      %s40 = sphi 0, %s39
      %s54 = sphi 0, %s40
      %s60 = sphi 0, %s62
      %s63 = sphi 0, %s60
      %s64 = sphi 0, %s63
      %s80 = sphi 0, %s64
      %s88 = sphi 0, %s90
      %s91 = sphi 0, %s88
      %s92 = sphi 0, %s91
      %s108 = sphi 0, %s92
      %s116 = sphi 0, %s118
      %s119 = sphi 0, %s116
      %s120 = sphi 0, %s119
      %s136 = sphi 0, %s120
      %s140 = sphi 0, %s140
      %s142 = sphi 0, %s140
      %s143 = sphi 0, %s142
      %s157 = sphi 0, %s143
      %s161 = sphi 0, %s161
      %s163 = sphi 0, %s161
      %s164 = sphi 0, %s163
      %s178 = sphi 0, %s164
      %s182 = sphi 0, %s182
      %s184 = sphi 0, %s182
      %s185 = sphi 0, %s184
      %s199 = sphi 0, %s185
      %s207 = sphi 0, %s209
      %s210 = sphi 0, %s207
      %s211 = sphi 0, %s210
      %s227 = sphi 0, %s211
    $region4: #{tpu_custom_call.1} parent=1 // loop_header_branch
      %20 = sbr.rel (%p18) target = $region8
    $region5: #{tpu_custom_call.1} parent=1 // loop_body
      %s22 = ssub.s32 %s17, 1
      %s23 = ssub.s32 %s17, 2
      %s30 = sadd.s32 1, %s25
      %p31 = scmp.ge.s32.totalorder %s30, 2
      %s32 = scalar_select %p31, 0, %s30
      %s33 = sadd.s32 1, %s24
      %s34 = scalar_select %p31, %s33, %s24
      %p35 = scmp.ge.s32.totalorder %s34, 1
      %s36 = scalar_select %p35, 0, %s34
      %s38 = sadd.s32 %s37, 1
      %p41 = scmp.eq.s32.totalorder %s17, 1
      %p42 = scmp.ne.s32.totalorder %s37, %s39
      %p43 = scmp.eq.s32.totalorder %s17, 0
      %p44 = por %p42, %p43
      %p45 = scmp.ne.s32.totalorder %s37, %s39
      %p46 = scmp.eq.s32.totalorder %s22, 1
      %p47 = por %p45, %p46
      %p48 = scmp.ne.s32.totalorder %s39, %s40
      %p49 = scmp.eq.s32.totalorder %s22, 0
      %p50 = por %p48, %p49
      %p51 = scmp.ne.s32.totalorder %s39, %s40
      %p52 = scmp.eq.s32.totalorder %s23, 1
      %p53 = por %p51, %p52
      %p55 = scmp.ne.s32.totalorder %s40, %s54
      %p56 = scmp.eq.s32.totalorder %s23, 0
      %p57 = por %p55, %p56
      %s58 = ssub.s32 %s24, %s36
      %p59 = scmp.eq.s32.totalorder %s58, 0
      %s61 = sadd.s32 %s60, 1
      %s62 = scalar_select %p59, %s60, %s61
      %p65 = pneg %p59
      %p66 = scmp.eq.s32.totalorder %s17, 1
      %p67 = por %p65, %p66
      %p68 = scmp.ne.s32.totalorder %s60, %s63
      %p69 = scmp.eq.s32.totalorder %s17, 0
      %p70 = por %p68, %p69
      %p71 = scmp.ne.s32.totalorder %s60, %s63
      %p72 = scmp.eq.s32.totalorder %s22, 1
      %p73 = por %p71, %p72
      %p74 = scmp.ne.s32.totalorder %s63, %s64
      %p75 = scmp.eq.s32.totalorder %s22, 0
      %p76 = por %p74, %p75
      %p77 = scmp.ne.s32.totalorder %s63, %s64
      %p78 = scmp.eq.s32.totalorder %s23, 1
      %p79 = por %p77, %p78
      %p81 = scmp.ne.s32.totalorder %s64, %s80
      %p82 = scmp.eq.s32.totalorder %s23, 0
      %p83 = por %p81, %p82
      %s84 = ssub.s32 %s25, %s32
      %s85 = ssub.s32 %s24, %s36
      %s86 = sor.u32 %s84, %s85
      %p87 = scmp.eq.s32.totalorder %s86, 0
      %s89 = sadd.s32 %s88, 1
      %s90 = scalar_select %p87, %s88, %s89
      %p93 = pneg %p87
      %p94 = scmp.eq.s32.totalorder %s17, 1
      %p95 = por %p93, %p94
      %p96 = scmp.ne.s32.totalorder %s88, %s91
      %p97 = scmp.eq.s32.totalorder %s17, 0
      %p98 = por %p96, %p97
      %p99 = scmp.ne.s32.totalorder %s88, %s91
      %p100 = scmp.eq.s32.totalorder %s22, 1
      %p101 = por %p99, %p100
      %p102 = scmp.ne.s32.totalorder %s91, %s92
      %p103 = scmp.eq.s32.totalorder %s22, 0
      %p104 = por %p102, %p103
      %p105 = scmp.ne.s32.totalorder %s91, %s92
      %p106 = scmp.eq.s32.totalorder %s23, 1
      %p107 = por %p105, %p106
      %p109 = scmp.ne.s32.totalorder %s92, %s108
      %p110 = scmp.eq.s32.totalorder %s23, 0
      %p111 = por %p109, %p110
      %s112 = ssub.s32 %s25, %s32
      %s113 = ssub.s32 %s24, %s36
      %s114 = sor.u32 %s112, %s113
      %p115 = scmp.eq.s32.totalorder %s114, 0
      %s117 = sadd.s32 %s116, 1
      %s118 = scalar_select %p115, %s116, %s117
      %p121 = pneg %p115
      %p122 = scmp.eq.s32.totalorder %s17, 1
      %p123 = por %p121, %p122
      %p124 = scmp.ne.s32.totalorder %s116, %s119
      %p125 = scmp.eq.s32.totalorder %s17, 0
      %p126 = por %p124, %p125
      %p127 = scmp.ne.s32.totalorder %s116, %s119
      %p128 = scmp.eq.s32.totalorder %s22, 1
      %p129 = por %p127, %p128
      %p130 = scmp.ne.s32.totalorder %s119, %s120
      %p131 = scmp.eq.s32.totalorder %s22, 0
      %p132 = por %p130, %p131
      %p133 = scmp.ne.s32.totalorder %s119, %s120
      %p134 = scmp.eq.s32.totalorder %s23, 1
      %p135 = por %p133, %p134
      %p137 = scmp.ne.s32.totalorder %s120, %s136
      %p138 = scmp.eq.s32.totalorder %s23, 0
      %p139 = por %p137, %p138
      %s141 = sadd.s32 %s140, 1
      %p144 = scmp.eq.s32.totalorder %s17, 1
      %p145 = scmp.ne.s32.totalorder %s140, %s142
      %p146 = scmp.eq.s32.totalorder %s17, 0
      %p147 = por %p145, %p146
      %p148 = scmp.ne.s32.totalorder %s140, %s142
      %p149 = scmp.eq.s32.totalorder %s22, 1
      %p150 = por %p148, %p149
      %p151 = scmp.ne.s32.totalorder %s142, %s143
      %p152 = scmp.eq.s32.totalorder %s22, 0
      %p153 = por %p151, %p152
      %p154 = scmp.ne.s32.totalorder %s142, %s143
      %p155 = scmp.eq.s32.totalorder %s23, 1
      %p156 = por %p154, %p155
      %p158 = scmp.ne.s32.totalorder %s143, %s157
      %p159 = scmp.eq.s32.totalorder %s23, 0
      %p160 = por %p158, %p159
      %s162 = sadd.s32 %s161, 1
      %p165 = scmp.eq.s32.totalorder %s17, 1
      %p166 = scmp.ne.s32.totalorder %s161, %s163
      %p167 = scmp.eq.s32.totalorder %s17, 0
      %p168 = por %p166, %p167
      %p169 = scmp.ne.s32.totalorder %s161, %s163
      %p170 = scmp.eq.s32.totalorder %s22, 1
      %p171 = por %p169, %p170
      %p172 = scmp.ne.s32.totalorder %s163, %s164
      %p173 = scmp.eq.s32.totalorder %s22, 0
      %p174 = por %p172, %p173
      %p175 = scmp.ne.s32.totalorder %s163, %s164
      %p176 = scmp.eq.s32.totalorder %s23, 1
      %p177 = por %p175, %p176
      %p179 = scmp.ne.s32.totalorder %s164, %s178
      %p180 = scmp.eq.s32.totalorder %s23, 0
      %p181 = por %p179, %p180
      %s183 = sadd.s32 %s182, 1
      %p186 = scmp.eq.s32.totalorder %s17, 1
      %p187 = scmp.ne.s32.totalorder %s182, %s184
      %p188 = scmp.eq.s32.totalorder %s17, 0
      %p189 = por %p187, %p188
      %p190 = scmp.ne.s32.totalorder %s182, %s184
      %p191 = scmp.eq.s32.totalorder %s22, 1
      %p192 = por %p190, %p191
      %p193 = scmp.ne.s32.totalorder %s184, %s185
      %p194 = scmp.eq.s32.totalorder %s22, 0
      %p195 = por %p193, %p194
      %p196 = scmp.ne.s32.totalorder %s184, %s185
      %p197 = scmp.eq.s32.totalorder %s23, 1
      %p198 = por %p196, %p197
      %p200 = scmp.ne.s32.totalorder %s185, %s199
      %p201 = scmp.eq.s32.totalorder %s23, 0
      %p202 = por %p200, %p201
      %s203 = ssub.s32 %s25, %s32
      %s204 = ssub.s32 %s24, %s36
      %s205 = sor.u32 %s203, %s204
      %p206 = scmp.eq.s32.totalorder %s205, 0
      %s208 = sadd.s32 %s207, 1
      %s209 = scalar_select %p206, %s207, %s208
      %p212 = pneg %p206
      %p213 = scmp.eq.s32.totalorder %s17, 1
      %p214 = por %p212, %p213
      %p215 = scmp.ne.s32.totalorder %s207, %s210
      %p216 = scmp.eq.s32.totalorder %s17, 0
      %p217 = por %p215, %p216
      %p218 = scmp.ne.s32.totalorder %s207, %s210
      %p219 = scmp.eq.s32.totalorder %s22, 1
      %p220 = por %p218, %p219
      %p221 = scmp.ne.s32.totalorder %s210, %s211
      %p222 = scmp.eq.s32.totalorder %s22, 0
      %p223 = por %p221, %p222
      %p224 = scmp.ne.s32.totalorder %s210, %s211
      %p225 = scmp.eq.s32.totalorder %s23, 1
      %p226 = por %p224, %p225
      %p228 = scmp.ne.s32.totalorder %s211, %s227
      %p229 = scmp.eq.s32.totalorder %s23, 0
      %p230 = por %p228, %p229
      %p231 = scmp.le.s32.totalorder 1, %s17
      %p232 = scmp.lt.s32.totalorder %s17, 3
      %p233 = pnand %p231, %p232
      %p234 = pneg %p233
      // Predicated region
      $region9: #{tpu_custom_call.1} parent=5 // pred_check
        _
      $region10: #{tpu_custom_call.1} parent=5 // pred_check_branch
        %236 = sbr.rel (%p233) target = $region12
      $region11: #{tpu_custom_call.1} parent=5 // pred_region
        %s237 = ssub.s32 %s17, 1
        // Predicated region
        $region13: #{tpu_custom_call.1} parent=11 // pred_check
          %p238 = pneg %p50
        $region14: #{tpu_custom_call.1} parent=11 // pred_check_branch
          %240 = sbr.rel (%p238) target = $region16
        $region15: #{tpu_custom_call.1} parent=11 // pred_region
          %s242 = ssub.s32 16000, 16000
          %243 = vsyncadd [#allocation3], %s242
          %s244 = sshll.u32 [#allocation2], 4
          %s245 = int_to_ptr.vmem [resolvable:$true] %s244
          %250 = dma.hbm_to_vmem [thread:$0]  %s0, 16000, %s245, [#allocation3], 128, 128, 8
        $region16: #{tpu_custom_call.1} parent=11 // pred_fallthru
          _
        // Predicated region
        $region17: #{tpu_custom_call.1} parent=11 // pred_check
          %p251 = pneg %p76
        $region18: #{tpu_custom_call.1} parent=11 // pred_check_branch
          %253 = sbr.rel (%p251) target = $region20
        $region19: #{tpu_custom_call.1} parent=11 // pred_region
          %p254 = scmp.lt.s32.totalorder %s26, 0
          %s255 = scalar_select %p254, %s26, 0
          %s256 = smul.addr %s255, 8
          %s257 = scalar_lea.vmem %s1, %s256
        $region20: #{tpu_custom_call.1} parent=11 // pred_fallthru
          _
        // Predicated region
        $region21: #{tpu_custom_call.1} parent=11 // pred_check
          %p258 = pneg %p153
        $region22: #{tpu_custom_call.1} parent=11 // pred_check_branch
          %260 = sbr.rel (%p258) target = $region24
        $region23: #{tpu_custom_call.1} parent=11 // pred_region
          _
        $region24: #{tpu_custom_call.1} parent=11 // pred_fallthru
          _
        // Predicated region
        $region25: #{tpu_custom_call.1} parent=11 // pred_check
          %p261 = pneg %p174
        $region26: #{tpu_custom_call.1} parent=11 // pred_check_branch
          %263 = sbr.rel (%p261) target = $region28
        $region27: #{tpu_custom_call.1} parent=11 // pred_region
          _
        $region28: #{tpu_custom_call.1} parent=11 // pred_fallthru
          _
        // Predicated region
        $region29: #{tpu_custom_call.1} parent=11 // pred_check
          %p264 = pneg %p195
        $region30: #{tpu_custom_call.1} parent=11 // pred_check_branch
          %266 = sbr.rel (%p264) target = $region32
        $region31: #{tpu_custom_call.1} parent=11 // pred_region
          _
        $region32: #{tpu_custom_call.1} parent=11 // pred_fallthru
          _
      $region12: #{tpu_custom_call.1} parent=5 // pred_fallthru
        _
      %p267 = scmp.lt.s32.totalorder %s17, 2
      // Predicated region
      $region33: #{tpu_custom_call.1} parent=5 // pred_check
        %p268 = pneg %p267
      $region34: #{tpu_custom_call.1} parent=5 // pred_check_branch
        %270 = sbr.rel (%p268) target = $region36
      $region35: #{tpu_custom_call.1} parent=5 // pred_region
        // Predicated region
        $region37: #{tpu_custom_call.1} parent=35 // pred_check
          %p271 = pneg %p98
        $region38: #{tpu_custom_call.1} parent=35 // pred_check_branch
          %273 = sbr.rel (%p271) target = $region40
        $region39: #{tpu_custom_call.1} parent=35 // pred_region
          %p274 = scmp.lt.s32.totalorder %s25, 1
          %s275 = scalar_select %p274, %s25, 1
          %p276 = scmp.lt.s32.totalorder %s24, 0
          %s277 = scalar_select %p276, %s24, 0
          %s278 = sadd.s32 %s277, %s275
          %s279 = smul.addr %s278, 8
          %s280 = scalar_lea.vmem %s2, %s279
        $region40: #{tpu_custom_call.1} parent=35 // pred_fallthru
          _
        // Predicated region
        $region41: #{tpu_custom_call.1} parent=35 // pred_check
          %p281 = pneg %p126
        $region42: #{tpu_custom_call.1} parent=35 // pred_check_branch
          %283 = sbr.rel (%p281) target = $region44
        $region43: #{tpu_custom_call.1} parent=35 // pred_region
          %p284 = scmp.lt.s32.totalorder %s25, 1
          %s285 = scalar_select %p284, %s25, 1
          %p286 = scmp.lt.s32.totalorder %s24, 0
          %s287 = scalar_select %p286, %s24, 0
          %s288 = sadd.s32 %s287, %s285
          %s289 = smul.addr %s288, 8
          %s290 = scalar_lea.vmem %s3, %s289
        $region44: #{tpu_custom_call.1} parent=35 // pred_fallthru
          _
      $region36: #{tpu_custom_call.1} parent=5 // pred_fallthru
        _
      %p291 = scmp.le.s32.totalorder 1, %s17
      %p292 = scmp.lt.s32.totalorder %s17, 3
      %p293 = pnand %p291, %p292
      %p294 = pneg %p293
      // Predicated region
      $region45: #{tpu_custom_call.1} parent=5 // pred_check
        _
      $region46: #{tpu_custom_call.1} parent=5 // pred_check_branch
        %296 = sbr.rel (%p293) target = $region48
      $region47: #{tpu_custom_call.1} parent=5 // pred_region
        %s297 = ssub.s32 %s17, 1
        // Predicated region
        $region49: #{tpu_custom_call.1} parent=47 // pred_check
          %p298 = pneg %p50
        $region50: #{tpu_custom_call.1} parent=47 // pred_check_branch
          %300 = sbr.rel (%p298) target = $region52
        $region51: #{tpu_custom_call.1} parent=47 // pred_region
          %301 = dma.done [#allocation3], 16000
        $region52: #{tpu_custom_call.1} parent=47 // pred_fallthru
          _
        %p302 = pneg %p50
        %p303 = pneg %p47
        %p304 = scmp.lt.s32.totalorder %s26, 0
        %s305 = scalar_select %p304, %s26, 0
        %s306 = smul.addr %s305, 8
        %s307 = scalar_lea.vmem %s1, %s306
        %p308 = pneg %p76
        %p309 = pneg %p73
        %p310 = scmp.lt.s32.totalorder %s27, 1
        %s311 = scalar_select %p310, %s27, 1
        %p312 = scmp.lt.s32.totalorder %s26, 0
        %s313 = scalar_select %p312, %s26, 0
        %s314 = sadd.s32 %s313, %s311
        %s315 = smul.addr %s314, 8
        %s316 = scalar_lea.vmem %s2, %s315
        %p317 = pneg %p104
        %p318 = pneg %p101
        %p319 = scmp.lt.s32.totalorder %s27, 1
        %s320 = scalar_select %p319, %s27, 1
        %p321 = scmp.lt.s32.totalorder %s26, 0
        %s322 = scalar_select %p321, %s26, 0
        %s323 = sadd.s32 %s322, %s320
        %s324 = smul.addr %s323, 8
        %s325 = scalar_lea.vmem %s3, %s324
        %p326 = pneg %p132
        %p327 = pneg %p129
        %p328 = pneg %p153
        %p329 = pneg %p150
        %p330 = pneg %p174
        %p331 = pneg %p171
        %p332 = pneg %p195
        %p333 = pneg %p192
        %p334 = pneg %p223
        %p335 = pneg %p220
        %s336 = sand.u32 %s210, 1
        %s337 = scalar_lea.sflag [#allocation4], %s336
        %s338 = sand.u32 %s210, 1
        %s339 = smul.addr %s338, 8
        %s340 = scalar_lea.vmem [#allocation5], %s339
        %p341 = scmp.lt.s32.totalorder %s26, 0
        %s342 = scalar_select %p341, %s26, 0
        %s343 = smul.addr %s342, 8
        %s344 = scalar_lea.vmem %s1, %s343
        %p345 = scmp.lt.s32.totalorder %s27, 1
        %s346 = scalar_select %p345, %s27, 1
        %p347 = scmp.lt.s32.totalorder %s26, 0
        %s348 = scalar_select %p347, %s26, 0
        %s349 = sadd.s32 %s348, %s346
        %s350 = smul.addr %s349, 8
        %s351 = scalar_lea.vmem %s2, %s350
        %p352 = scmp.lt.s32.totalorder %s27, 1
        %s353 = scalar_select %p352, %s27, 1
        %p354 = scmp.lt.s32.totalorder %s26, 0
        %s355 = scalar_select %p354, %s26, 0
        %s356 = sadd.s32 %s355, %s353
        %s357 = smul.addr %s356, 8
        %s358 = scalar_lea.vmem %s3, %s357
        %v359 = vld [vmem:[%s351] sm:$0xff]
        %v360 = vlaneseq
        %v361 = vand.u32 %v360, 127
        %v362 = vadd.s32 %v361, 128
        %v363 = vadd.s32 %v361, 256
        %v364 = vadd.s32 %v361, 384
        %v365 = vadd.s32 %v361, 512
        %v366 = vadd.s32 %v361, 640
        %v367 = vadd.s32 %v361, 768
        %v368 = vadd.s32 %v361, 896
        %369 = vset.pattern.permute.xlu0 0
        %370 = vperm.xlu0 %369, %v359
        %v371 = vpop.permute.xlu0 %370
        %vm372 = vcmp.eq.s32.totalorder %v371, %v361
        %vm373 = vcmp.eq.s32.totalorder %v371, %v362
        %vm374 = vcmp.eq.s32.totalorder %v371, %v363
        %vm375 = vcmp.eq.s32.totalorder %v371, %v364
        %vm376 = vcmp.eq.s32.totalorder %v371, %v365
        %vm377 = vcmp.eq.s32.totalorder %v371, %v366
        %vm378 = vcmp.eq.s32.totalorder %v371, %v367
        %vm379 = vcmp.eq.s32.totalorder %v371, %v368
        %v380 = vsel %vm372, 1, 0
        %v381 = vsel %vm373, 1, 0
        %v382 = vsel %vm374, 1, 0
        %v383 = vsel %vm375, 1, 0
        %v384 = vsel %vm376, 1, 0
        %v385 = vsel %vm377, 1, 0
        %v386 = vsel %vm378, 1, 0
        %v387 = vsel %vm379, 1, 0
        %v388 = vcvt.s32.f32 %v380
        %v389 = vcvt.s32.f32 %v381
        %v390 = vcvt.s32.f32 %v382
        %v391 = vcvt.s32.f32 %v383
        %v392 = vcvt.s32.f32 %v384
        %v393 = vcvt.s32.f32 %v385
        %v394 = vcvt.s32.f32 %v386
        %v395 = vcvt.s32.f32 %v387
        %v396 = vld [vmem:[#allocation2] sm:$0xff]
        %v397 = vld [vmem:[#allocation2 + $0x8] sm:$0xff]
        %v398 = vld [vmem:[#allocation2 + $0x10] sm:$0xff]
        %v399 = vld [vmem:[#allocation2 + $0x18] sm:$0xff]
        %v400 = vld [vmem:[#allocation2 + $0x20] sm:$0xff]
        %v401 = vld [vmem:[#allocation2 + $0x28] sm:$0xff]
        %v402 = vld [vmem:[#allocation2 + $0x30] sm:$0xff]
        %v403 = vld [vmem:[#allocation2 + $0x38] sm:$0xff]
        %v404 = vld [vmem:[#allocation2 + $0x40] sm:$0xff]
        %v405 = vld [vmem:[#allocation2 + $0x48] sm:$0xff]
        %v406 = vld [vmem:[#allocation2 + $0x50] sm:$0xff]
        %v407 = vld [vmem:[#allocation2 + $0x58] sm:$0xff]
        %v408 = vld [vmem:[#allocation2 + $0x60] sm:$0xff]
        %v409 = vld [vmem:[#allocation2 + $0x68] sm:$0xff]
        %v410 = vld [vmem:[#allocation2 + $0x70] sm:$0xff]
        %v411 = vld [vmem:[#allocation2 + $0x78] sm:$0xff]
        %v412 = vld [vmem:[#allocation2 + $0x80] sm:$0xff]
        %v413 = vld [vmem:[#allocation2 + $0x88] sm:$0xff]
        %v414 = vld [vmem:[#allocation2 + $0x90] sm:$0xff]
        %v415 = vld [vmem:[#allocation2 + $0x98] sm:$0xff]
        %v416 = vld [vmem:[#allocation2 + $0xa0] sm:$0xff]
        %v417 = vld [vmem:[#allocation2 + $0xa8] sm:$0xff]
        %v418 = vld [vmem:[#allocation2 + $0xb0] sm:$0xff]
        %v419 = vld [vmem:[#allocation2 + $0xb8] sm:$0xff]
        %v420 = vld [vmem:[#allocation2 + $0xc0] sm:$0xff]
        %v421 = vld [vmem:[#allocation2 + $0xc8] sm:$0xff]
        %v422 = vld [vmem:[#allocation2 + $0xd0] sm:$0xff]
        %v423 = vld [vmem:[#allocation2 + $0xd8] sm:$0xff]
        %v424 = vld [vmem:[#allocation2 + $0xe0] sm:$0xff]
        %v425 = vld [vmem:[#allocation2 + $0xe8] sm:$0xff]
        %v426 = vld [vmem:[#allocation2 + $0xf0] sm:$0xff]
        %v427 = vld [vmem:[#allocation2 + $0xf8] sm:$0xff]
        %v428 = vld [vmem:[#allocation2 + $0x100] sm:$0xff]
        %v429 = vld [vmem:[#allocation2 + $0x108] sm:$0xff]
        %v430 = vld [vmem:[#allocation2 + $0x110] sm:$0xff]
        %v431 = vld [vmem:[#allocation2 + $0x118] sm:$0xff]
        %v432 = vld [vmem:[#allocation2 + $0x120] sm:$0xff]
        %v433 = vld [vmem:[#allocation2 + $0x128] sm:$0xff]
        %v434 = vld [vmem:[#allocation2 + $0x130] sm:$0xff]
        %v435 = vld [vmem:[#allocation2 + $0x138] sm:$0xff]
        %v436 = vld [vmem:[#allocation2 + $0x140] sm:$0xff]
        %v437 = vld [vmem:[#allocation2 + $0x148] sm:$0xff]
        %v438 = vld [vmem:[#allocation2 + $0x150] sm:$0xff]
        %v439 = vld [vmem:[#allocation2 + $0x158] sm:$0xff]
        %v440 = vld [vmem:[#allocation2 + $0x160] sm:$0xff]
        %v441 = vld [vmem:[#allocation2 + $0x168] sm:$0xff]
        %v442 = vld [vmem:[#allocation2 + $0x170] sm:$0xff]
        %v443 = vld [vmem:[#allocation2 + $0x178] sm:$0xff]
        %v444 = vld [vmem:[#allocation2 + $0x180] sm:$0xff]
        %v445 = vld [vmem:[#allocation2 + $0x188] sm:$0xff]
        %v446 = vld [vmem:[#allocation2 + $0x190] sm:$0xff]
        %v447 = vld [vmem:[#allocation2 + $0x198] sm:$0xff]
        %v448 = vld [vmem:[#allocation2 + $0x1a0] sm:$0xff]
        %v449 = vld [vmem:[#allocation2 + $0x1a8] sm:$0xff]
        %v450 = vld [vmem:[#allocation2 + $0x1b0] sm:$0xff]
        %v451 = vld [vmem:[#allocation2 + $0x1b8] sm:$0xff]
        %v452 = vld [vmem:[#allocation2 + $0x1c0] sm:$0xff]
        %v453 = vld [vmem:[#allocation2 + $0x1c8] sm:$0xff]
        %v454 = vld [vmem:[#allocation2 + $0x1d0] sm:$0xff]
        %v455 = vld [vmem:[#allocation2 + $0x1d8] sm:$0xff]
        %v456 = vld [vmem:[#allocation2 + $0x1e0] sm:$0xff]
        %v457 = vld [vmem:[#allocation2 + $0x1e8] sm:$0xff]
        %v458 = vld [vmem:[#allocation2 + $0x1f0] sm:$0xff]
        %v459 = vld [vmem:[#allocation2 + $0x1f8] sm:$0xff]
        %v460 = vld [vmem:[#allocation2 + $0x200] sm:$0xff]
        %v461 = vld [vmem:[#allocation2 + $0x208] sm:$0xff]
        %v462 = vld [vmem:[#allocation2 + $0x210] sm:$0xff]
        %v463 = vld [vmem:[#allocation2 + $0x218] sm:$0xff]
        %v464 = vld [vmem:[#allocation2 + $0x220] sm:$0xff]
        %v465 = vld [vmem:[#allocation2 + $0x228] sm:$0xff]
        %v466 = vld [vmem:[#allocation2 + $0x230] sm:$0xff]
        %v467 = vld [vmem:[#allocation2 + $0x238] sm:$0xff]
        %v468 = vld [vmem:[#allocation2 + $0x240] sm:$0xff]
        %v469 = vld [vmem:[#allocation2 + $0x248] sm:$0xff]
        %v470 = vld [vmem:[#allocation2 + $0x250] sm:$0xff]
        %v471 = vld [vmem:[#allocation2 + $0x258] sm:$0xff]
        %v472 = vld [vmem:[#allocation2 + $0x260] sm:$0xff]
        %v473 = vld [vmem:[#allocation2 + $0x268] sm:$0xff]
        %v474 = vld [vmem:[#allocation2 + $0x270] sm:$0xff]
        %v475 = vld [vmem:[#allocation2 + $0x278] sm:$0xff]
        %v476 = vld [vmem:[#allocation2 + $0x280] sm:$0xff]
        %v477 = vld [vmem:[#allocation2 + $0x288] sm:$0xff]
        %v478 = vld [vmem:[#allocation2 + $0x290] sm:$0xff]
        %v479 = vld [vmem:[#allocation2 + $0x298] sm:$0xff]
        %v480 = vld [vmem:[#allocation2 + $0x2a0] sm:$0xff]
        %v481 = vld [vmem:[#allocation2 + $0x2a8] sm:$0xff]
        %v482 = vld [vmem:[#allocation2 + $0x2b0] sm:$0xff]
        %v483 = vld [vmem:[#allocation2 + $0x2b8] sm:$0xff]
        %v484 = vld [vmem:[#allocation2 + $0x2c0] sm:$0xff]
        %v485 = vld [vmem:[#allocation2 + $0x2c8] sm:$0xff]
        %v486 = vld [vmem:[#allocation2 + $0x2d0] sm:$0xff]
        %v487 = vld [vmem:[#allocation2 + $0x2d8] sm:$0xff]
        %v488 = vld [vmem:[#allocation2 + $0x2e0] sm:$0xff]
        %v489 = vld [vmem:[#allocation2 + $0x2e8] sm:$0xff]
        %v490 = vld [vmem:[#allocation2 + $0x2f0] sm:$0xff]
        %v491 = vld [vmem:[#allocation2 + $0x2f8] sm:$0xff]
        %v492 = vld [vmem:[#allocation2 + $0x300] sm:$0xff]
        %v493 = vld [vmem:[#allocation2 + $0x308] sm:$0xff]
        %v494 = vld [vmem:[#allocation2 + $0x310] sm:$0xff]
        %v495 = vld [vmem:[#allocation2 + $0x318] sm:$0xff]
        %v496 = vld [vmem:[#allocation2 + $0x320] sm:$0xff]
        %v497 = vld [vmem:[#allocation2 + $0x328] sm:$0xff]
        %v498 = vld [vmem:[#allocation2 + $0x330] sm:$0xff]
        %v499 = vld [vmem:[#allocation2 + $0x338] sm:$0xff]
        %v500 = vld [vmem:[#allocation2 + $0x340] sm:$0xff]
        %v501 = vld [vmem:[#allocation2 + $0x348] sm:$0xff]
        %v502 = vld [vmem:[#allocation2 + $0x350] sm:$0xff]
        %v503 = vld [vmem:[#allocation2 + $0x358] sm:$0xff]
        %v504 = vld [vmem:[#allocation2 + $0x360] sm:$0xff]
        %v505 = vld [vmem:[#allocation2 + $0x368] sm:$0xff]
        %v506 = vld [vmem:[#allocation2 + $0x370] sm:$0xff]
        %v507 = vld [vmem:[#allocation2 + $0x378] sm:$0xff]
        %v508 = vld [vmem:[#allocation2 + $0x380] sm:$0xff]
        %v509 = vld [vmem:[#allocation2 + $0x388] sm:$0xff]
        %v510 = vld [vmem:[#allocation2 + $0x390] sm:$0xff]
        %v511 = vld [vmem:[#allocation2 + $0x398] sm:$0xff]
        %v512 = vld [vmem:[#allocation2 + $0x3a0] sm:$0xff]
        %v513 = vld [vmem:[#allocation2 + $0x3a8] sm:$0xff]
        %v514 = vld [vmem:[#allocation2 + $0x3b0] sm:$0xff]
        %v515 = vld [vmem:[#allocation2 + $0x3b8] sm:$0xff]
        %v516 = vld [vmem:[#allocation2 + $0x3c0] sm:$0xff]
        %v517 = vld [vmem:[#allocation2 + $0x3c8] sm:$0xff]
        %v518 = vld [vmem:[#allocation2 + $0x3d0] sm:$0xff]
        %v519 = vld [vmem:[#allocation2 + $0x3d8] sm:$0xff]
        %v520 = vld [vmem:[#allocation2 + $0x3e0] sm:$0xff]
        %v521 = vld [vmem:[%s344] sm:$0xff]
        %vm522 = vcmask 850944
        %v524 = vsel %vm522, %v395, 0
        %526 = vmatprep.subr.mxu0 0.0
        %527 = vmatpush1.msra.mxu0 %v396
        %528 = vmatprep.subr.mxu0 0.0
        %529 = vmatpush1.msra.mxu0 %v397
        %530 = vmatprep.subr.mxu0 0.0
        %531 = vmatpush1.msra.mxu0 %v398
        %532 = vmatprep.subr.mxu0 0.0
        %533 = vmatpush1.msra.mxu0 %v399
        %534 = vmatprep.subr.mxu0 0.0
        %535 = vmatpush1.msra.mxu0 %v400
        %536 = vmatprep.subr.mxu0 0.0
        %537 = vmatpush1.msra.mxu0 %v401
        %538 = vmatprep.subr.mxu0 0.0
        %539 = vmatpush1.msra.mxu0 %v402
        %540 = vmatprep.subr.mxu0 0.0
        %541 = vmatpush1.msra.mxu0 %v403
        %542 = vmatprep.subr.mxu0 0.0
        %543 = vmatpush1.msra.mxu0 %v404
        %544 = vmatprep.subr.mxu0 0.0
        %545 = vmatpush1.msra.mxu0 %v405
        %546 = vmatprep.subr.mxu0 0.0
        %547 = vmatpush1.msra.mxu0 %v406
        %548 = vmatprep.subr.mxu0 0.0
        %549 = vmatpush1.msra.mxu0 %v407
        %550 = vmatprep.subr.mxu0 0.0
        %551 = vmatpush1.msra.mxu0 %v408
        %552 = vmatprep.subr.mxu0 0.0
        %553 = vmatpush1.msra.mxu0 %v409
        %554 = vmatprep.subr.mxu0 0.0
        %555 = vmatpush1.msra.mxu0 %v410
        %556 = vmatprep.subr.mxu0 0.0
        %557 = vmatpush1.msra.mxu0 %v411
        %558 = vmatprep.subr.mxu0 0.0
        %559 = vmatpush1.msra.mxu0 %v412
        %560 = vmatprep.subr.mxu0 0.0
        %561 = vmatpush1.msra.mxu0 %v413
        %562 = vmatprep.subr.mxu0 0.0
        %563 = vmatpush1.msra.mxu0 %v414
        %564 = vmatprep.subr.mxu0 0.0
        %565 = vmatpush1.msra.mxu0 %v415
        %566 = vmatprep.subr.mxu0 0.0
        %567 = vmatpush1.msra.mxu0 %v416
        %568 = vmatprep.subr.mxu0 0.0
        %569 = vmatpush1.msra.mxu0 %v417
        %570 = vmatprep.subr.mxu0 0.0
        %571 = vmatpush1.msra.mxu0 %v418
        %572 = vmatprep.subr.mxu0 0.0
        %573 = vmatpush1.msra.mxu0 %v419
        %574 = vmatprep.subr.mxu0 0.0
        %575 = vmatpush1.msra.mxu0 %v420
        %576 = vmatprep.subr.mxu0 0.0
        %577 = vmatpush1.msra.mxu0 %v421
        %578 = vmatprep.subr.mxu0 0.0
        %579 = vmatpush1.msra.mxu0 %v422
        %580 = vmatprep.subr.mxu0 0.0
        %581 = vmatpush1.msra.mxu0 %v423
        %582 = vmatprep.subr.mxu0 0.0
        %583 = vmatpush1.msra.mxu0 %v424
        %584 = vmatprep.subr.mxu0 0.0
        %585 = vmatpush1.msra.mxu0 %v425
        %586 = vmatprep.subr.mxu0 0.0
        %587 = vmatpush1.msra.mxu0 %v426
        %588 = vmatprep.subr.mxu0 0.0
        %589 = vmatpush1.msra.mxu0 %v427
        %590 = vmatprep.mubr.f32.mxu0 %v389
        %591 = vmatmul.mubr.f32.gmra.mrb[0].mxu0 %v388
        %v592 = vpop.f32.mrb[0].mxu0
        %v593 = vadd.f32 %v521, %v592
        %v594 = vpop.f32.mrb[0].mxu0
        %595 = vdwg.mxu0
        %596 = vmatprep.subr.mxu0 0.0
        %597 = vmatpush1.msra.mxu0 %v428
        %598 = vmatprep.subr.mxu0 0.0
        %599 = vmatpush1.msra.mxu0 %v429
        %600 = vmatprep.subr.mxu0 0.0
        %601 = vmatpush1.msra.mxu0 %v430
        %602 = vmatprep.subr.mxu0 0.0
        %603 = vmatpush1.msra.mxu0 %v431
        %604 = vmatprep.subr.mxu0 0.0
        %605 = vmatpush1.msra.mxu0 %v432
        %606 = vmatprep.subr.mxu0 0.0
        %607 = vmatpush1.msra.mxu0 %v433
        %608 = vmatprep.subr.mxu0 0.0
        %609 = vmatpush1.msra.mxu0 %v434
        %610 = vmatprep.subr.mxu0 0.0
        %611 = vmatpush1.msra.mxu0 %v435
        %612 = vmatprep.subr.mxu0 0.0
        %613 = vmatpush1.msra.mxu0 %v436
        %614 = vmatprep.subr.mxu0 0.0
        %615 = vmatpush1.msra.mxu0 %v437
        %616 = vmatprep.subr.mxu0 0.0
        %617 = vmatpush1.msra.mxu0 %v438
        %618 = vmatprep.subr.mxu0 0.0
        %619 = vmatpush1.msra.mxu0 %v439
        %620 = vmatprep.subr.mxu0 0.0
        %621 = vmatpush1.msra.mxu0 %v440
        %622 = vmatprep.subr.mxu0 0.0
        %623 = vmatpush1.msra.mxu0 %v441
        %624 = vmatprep.subr.mxu0 0.0
        %625 = vmatpush1.msra.mxu0 %v442
        %626 = vmatprep.subr.mxu0 0.0
        %627 = vmatpush1.msra.mxu0 %v443
        %628 = vmatprep.subr.mxu0 0.0
        %629 = vmatpush1.msra.mxu0 %v444
        %630 = vmatprep.subr.mxu0 0.0
        %631 = vmatpush1.msra.mxu0 %v445
        %632 = vmatprep.subr.mxu0 0.0
        %633 = vmatpush1.msra.mxu0 %v446
        %634 = vmatprep.subr.mxu0 0.0
        %635 = vmatpush1.msra.mxu0 %v447
        %636 = vmatprep.subr.mxu0 0.0
        %637 = vmatpush1.msra.mxu0 %v448
        %638 = vmatprep.subr.mxu0 0.0
        %639 = vmatpush1.msra.mxu0 %v449
        %640 = vmatprep.subr.mxu0 0.0
        %641 = vmatpush1.msra.mxu0 %v450
        %642 = vmatprep.subr.mxu0 0.0
        %643 = vmatpush1.msra.mxu0 %v451
        %644 = vmatprep.subr.mxu0 0.0
        %645 = vmatpush1.msra.mxu0 %v452
        %646 = vmatprep.subr.mxu0 0.0
        %647 = vmatpush1.msra.mxu0 %v453
        %648 = vmatprep.subr.mxu0 0.0
        %649 = vmatpush1.msra.mxu0 %v454
        %650 = vmatprep.subr.mxu0 0.0
        %651 = vmatpush1.msra.mxu0 %v455
        %652 = vmatprep.subr.mxu0 0.0
        %653 = vmatpush1.msra.mxu0 %v456
        %654 = vmatprep.subr.mxu0 0.0
        %655 = vmatpush1.msra.mxu0 %v457
        %656 = vmatprep.subr.mxu0 0.0
        %657 = vmatpush1.msra.mxu0 %v458
        %658 = vmatprep.subr.mxu0 0.0
        %659 = vmatpush1.msra.mxu0 %v459
        %660 = vmatprep.mubr.f32.mxu0 %v391
        %661 = vmatmul.mubr.f32.gmra.mrb[0].mxu0 %v390
        %v662 = vpop.f32.mrb[0].mxu0
        %v663 = vadd.f32 %v593, %v662
        %v664 = vpop.f32.mrb[0].mxu0
        %665 = vdwg.mxu0
        %666 = vmatprep.subr.mxu0 0.0
        %667 = vmatpush1.msra.mxu0 %v460
        %668 = vmatprep.subr.mxu0 0.0
        %669 = vmatpush1.msra.mxu0 %v461
        %670 = vmatprep.subr.mxu0 0.0
        %671 = vmatpush1.msra.mxu0 %v462
        %672 = vmatprep.subr.mxu0 0.0
        %673 = vmatpush1.msra.mxu0 %v463
        %674 = vmatprep.subr.mxu0 0.0
        %675 = vmatpush1.msra.mxu0 %v464
        %676 = vmatprep.subr.mxu0 0.0
        %677 = vmatpush1.msra.mxu0 %v465
        %678 = vmatprep.subr.mxu0 0.0
        %679 = vmatpush1.msra.mxu0 %v466
        %680 = vmatprep.subr.mxu0 0.0
        %681 = vmatpush1.msra.mxu0 %v467
        %682 = vmatprep.subr.mxu0 0.0
        %683 = vmatpush1.msra.mxu0 %v468
        %684 = vmatprep.subr.mxu0 0.0
        %685 = vmatpush1.msra.mxu0 %v469
        %686 = vmatprep.subr.mxu0 0.0
        %687 = vmatpush1.msra.mxu0 %v470
        %688 = vmatprep.subr.mxu0 0.0
        %689 = vmatpush1.msra.mxu0 %v471
        %690 = vmatprep.subr.mxu0 0.0
        %691 = vmatpush1.msra.mxu0 %v472
        %692 = vmatprep.subr.mxu0 0.0
        %693 = vmatpush1.msra.mxu0 %v473
        %694 = vmatprep.subr.mxu0 0.0
        %695 = vmatpush1.msra.mxu0 %v474
        %696 = vmatprep.subr.mxu0 0.0
        %697 = vmatpush1.msra.mxu0 %v475
        %698 = vmatprep.subr.mxu0 0.0
        %699 = vmatpush1.msra.mxu0 %v476
        %700 = vmatprep.subr.mxu0 0.0
        %701 = vmatpush1.msra.mxu0 %v477
        %702 = vmatprep.subr.mxu0 0.0
        %703 = vmatpush1.msra.mxu0 %v478
        %704 = vmatprep.subr.mxu0 0.0
        %705 = vmatpush1.msra.mxu0 %v479
        %706 = vmatprep.subr.mxu0 0.0
        %707 = vmatpush1.msra.mxu0 %v480
        %708 = vmatprep.subr.mxu0 0.0
        %709 = vmatpush1.msra.mxu0 %v481
        %710 = vmatprep.subr.mxu0 0.0
        %711 = vmatpush1.msra.mxu0 %v482
        %712 = vmatprep.subr.mxu0 0.0
        %713 = vmatpush1.msra.mxu0 %v483
        %714 = vmatprep.subr.mxu0 0.0
        %715 = vmatpush1.msra.mxu0 %v484
        %716 = vmatprep.subr.mxu0 0.0
        %717 = vmatpush1.msra.mxu0 %v485
        %718 = vmatprep.subr.mxu0 0.0
        %719 = vmatpush1.msra.mxu0 %v486
        %720 = vmatprep.subr.mxu0 0.0
        %721 = vmatpush1.msra.mxu0 %v487
        %722 = vmatprep.subr.mxu0 0.0
        %723 = vmatpush1.msra.mxu0 %v488
        %724 = vmatprep.subr.mxu0 0.0
        %725 = vmatpush1.msra.mxu0 %v489
        %726 = vmatprep.subr.mxu0 0.0
        %727 = vmatpush1.msra.mxu0 %v490
        %728 = vmatprep.subr.mxu0 0.0
        %729 = vmatpush1.msra.mxu0 %v491
        %730 = vmatprep.mubr.f32.mxu0 %v393
        %731 = vmatmul.mubr.f32.gmra.mrb[0].mxu0 %v392
        %v732 = vpop.f32.mrb[0].mxu0
        %v733 = vadd.f32 %v663, %v732
        %v734 = vpop.f32.mrb[0].mxu0
        %735 = vdwg.mxu0
        %736 = vmatprep.subr.mxu0 0.0
        %737 = vmatpush1.msra.mxu0 %v492
        %738 = vmatprep.subr.mxu0 0.0
        %739 = vmatpush1.msra.mxu0 %v493
        %740 = vmatprep.subr.mxu0 0.0
        %741 = vmatpush1.msra.mxu0 %v494
        %742 = vmatprep.subr.mxu0 0.0
        %743 = vmatpush1.msra.mxu0 %v495
        %744 = vmatprep.subr.mxu0 0.0
        %745 = vmatpush1.msra.mxu0 %v496
        %746 = vmatprep.subr.mxu0 0.0
        %747 = vmatpush1.msra.mxu0 %v497
        %748 = vmatprep.subr.mxu0 0.0
        %749 = vmatpush1.msra.mxu0 %v498
        %750 = vmatprep.subr.mxu0 0.0
        %751 = vmatpush1.msra.mxu0 %v499
        %752 = vmatprep.subr.mxu0 0.0
        %753 = vmatpush1.msra.mxu0 %v500
        %754 = vmatprep.subr.mxu0 0.0
        %755 = vmatpush1.msra.mxu0 %v501
        %756 = vmatprep.subr.mxu0 0.0
        %757 = vmatpush1.msra.mxu0 %v502
        %758 = vmatprep.subr.mxu0 0.0
        %759 = vmatpush1.msra.mxu0 %v503
        %760 = vmatprep.subr.mxu0 0.0
        %761 = vmatpush1.msra.mxu0 %v504
        %762 = vmatprep.subr.mxu0 0.0
        %763 = vmatpush1.msra.mxu0 %v505
        %764 = vmatprep.subr.mxu0 0.0
        %765 = vmatpush1.msra.mxu0 %v506
        %766 = vmatprep.subr.mxu0 0.0
        %767 = vmatpush1.msra.mxu0 %v507
        %768 = vmatprep.subr.mxu0 0.0
        %769 = vmatpush1.msra.mxu0 %v508
        %770 = vmatprep.subr.mxu0 0.0
        %771 = vmatpush1.msra.mxu0 %v509
        %772 = vmatprep.subr.mxu0 0.0
        %773 = vmatpush1.msra.mxu0 %v510
        %774 = vmatprep.subr.mxu0 0.0
        %775 = vmatpush1.msra.mxu0 %v511
        %776 = vmatprep.subr.mxu0 0.0
        %777 = vmatpush1.msra.mxu0 %v512
        %778 = vmatprep.subr.mxu0 0.0
        %779 = vmatpush1.msra.mxu0 %v513
        %780 = vmatprep.subr.mxu0 0.0
        %781 = vmatpush1.msra.mxu0 %v514
        %782 = vmatprep.subr.mxu0 0.0
        %783 = vmatpush1.msra.mxu0 %v515
        %784 = vmatprep.subr.mxu0 0.0
        %785 = vmatpush1.msra.mxu0 %v516
        %786 = vmatprep.subr.mxu0 0.0
        %787 = vmatpush1.msra.mxu0 %v517
        %788 = vmatprep.subr.mxu0 0.0
        %789 = vmatpush1.msra.mxu0 %v518
        %790 = vmatprep.subr.mxu0 0.0
        %791 = vmatpush1.msra.mxu0 %v519
        %792 = vmatprep.subr.mxu0 0.0
        %793 = vmatpush1.msra.mxu0 %v520
        %794 = vmatprep.subr.mxu0 0.0
        %795 = vmatpush1.msra.mxu0 0.0
        %796 = vmatprep.subr.mxu0 0.0
        %797 = vmatpush1.msra.mxu0 0.0
        %798 = vmatprep.subr.mxu0 0.0
        %799 = vmatpush1.msra.mxu0 0.0
        %800 = vmatprep.mubr.f32.mxu0 %v524
        %801 = vmatmul.mubr.f32.gmra.mrb[0].mxu0 %v394
        %v802 = vpop.f32.mrb[0].mxu0
        %v803 = vadd.f32 %v733, %v802
        %v804 = vpop.f32.mrb[0].mxu0
        %805 = vdwg.mxu0
        %v806 = vld [vmem:[%s358] sm:$0xff]
        %v807 = vld [vmem:[%s4] sm:$0x1]
        %v808 = vlaneseq
        %v809 = vshrl.u32 %v808, 7
        %v810 = vsub.s32 0, %v809
        %v811 = vrot.slane %v807, %v810
        %v812 = vadd.f32 %v803, %v811
        %vm813 = vcmp.eq.s32.totalorder %v806, 1
        %v814 = vsel %vm813, 1, 0
        %v815 = vcvt.s32.f32 %v814
        %v816 = vld [vmem:[%s4 + $0x1] sm:$0x1]
        %818 = vset.pattern.permute.xlu0 0
        %819 = vperm.xlu0 %818, %v815
        %v820 = vpop.permute.xlu0 %819
        %v822 = vlaneseq
        %v823 = vshrl.u32 %v822, 7
        %v824 = vsub.s32 0, %v823
        %v825 = vrot.slane %v816, %v824
        %v826 = vmul.f32 %v820, %v825
        %v827 = vadd.f32 %v812, %v826
        %828 = vadd.xlane.f32.xlu0 %v827
        %v829 = vpop.xlane.xlu0 %828
        %v830 = vrcp.pop 128.0
        %v831 = vmul.f32 %v829, %v830
        %v832 = vsub.f32 %v827, %v831
        %v833 = vmul.f32 %v832, %v832
        %834 = vadd.xlane.f32.xlu0 %v833
        %v835 = vpop.xlane.xlu0 %834
        %v836 = vmul.f32 %v835, %v830
        %v837 = vadd.f32 %v836, 1e-05
        %v838 = vrsqrt.pop %v837
        %v839 = vmul.f32 %v832, %v838
        %v840 = vld [vmem:[%s5] sm:$0x1]
        %v842 = vlaneseq
        %v843 = vshrl.u32 %v842, 7
        %v844 = vsub.s32 0, %v843
        %v845 = vrot.slane %v840, %v844
        %v847 = vmul.f32 %v839, %v845
        %v848 = vld [vmem:[%s6] sm:$0x1]
        %v850 = vlaneseq
        %v851 = vshrl.u32 %v850, 7
        %v852 = vsub.s32 0, %v851
        %v853 = vrot.slane %v848, %v852
        %v855 = vadd.f32 %v847, %v853
        %856 = vst [vmem:[%s340] sm:$0xff] %v855
        %s857 = sand.u32 %s210, 1
        %s858 = scalar_lea.sflag [#allocation4], %s857
        %s859 = sand.u32 %s210, 1
        %s860 = smul.addr %s859, 8
        %s861 = scalar_lea.vmem [#allocation5], %s860
        // Predicated region
        $region53: #{tpu_custom_call.1} parent=47 // pred_check
          %p862 = pneg %p220
        $region54: #{tpu_custom_call.1} parent=47 // pred_check_branch
          %864 = sbr.rel (%p862) target = $region56
        $region55: #{tpu_custom_call.1} parent=47 // pred_region
          %s866 = ssub.s32 128, 128
          %867 = vsyncadd %s858, %s866
          %s868 = sadd.s32 %s26, %s27
          %s869 = smul.addr %s868, 128
          %s870 = scalar_lea.hbm %s7, %s869
          %s872 = sshll.u32 %s861, 4
          %s873 = int_to_ptr.vmem [resolvable:$true] %s872
          %875 = dma.vmem_to_hbm [thread:$0]  %s873, 128, %s870, %s858
        $region56: #{tpu_custom_call.1} parent=47 // pred_fallthru
          _
      $region48: #{tpu_custom_call.1} parent=5 // pred_fallthru
        _
      %p876 = scmp.le.s32.totalorder 2, %s17
      // Predicated region
      $region57: #{tpu_custom_call.1} parent=5 // pred_check
        %p877 = pneg %p876
      $region58: #{tpu_custom_call.1} parent=5 // pred_check_branch
        %879 = sbr.rel (%p877) target = $region60
      $region59: #{tpu_custom_call.1} parent=5 // pred_region
        %s880 = ssub.s32 %s17, 2
        // Predicated region
        $region61: #{tpu_custom_call.1} parent=59 // pred_check
          %p881 = pneg %p226
        $region62: #{tpu_custom_call.1} parent=59 // pred_check_branch
          %883 = sbr.rel (%p881) target = $region64
        $region63: #{tpu_custom_call.1} parent=59 // pred_region
          %s884 = sand.u32 %s211, 1
          %s885 = scalar_lea.sflag [#allocation4], %s884
          %s886 = sand.u32 %s211, 1
          %s887 = smul.addr %s886, 8
          %s888 = scalar_lea.vmem [#allocation5], %s887
          %889 = dma.done %s885, 128
        $region64: #{tpu_custom_call.1} parent=59 // pred_fallthru
          _
      $region60: #{tpu_custom_call.1} parent=5 // pred_fallthru
        _
    $region6: #{tpu_custom_call.1} parent=1 // loop_footer
      %s21 = sadd.s32 1, %s17
    $region7: #{tpu_custom_call.1} parent=1 // loop_footer_branch
      %16 = sbr.rel target = $region3
    $region8: #{tpu_custom_call.1} parent=1 // loop_exit
      _
    %890 = vsyncpa [#allocation3], 1
    %s891 = scalar_lea.sflag [#allocation3], 1
    %892 = vsyncpa %s891, 1
    %893 = vsyncpa [#allocation4], 1
    %s894 = scalar_lea.sflag [#allocation4], 1
    %895 = vsyncpa %s894, 1

</llo_original>
